<compile_context>
chip_gen: v7x
topology: tpu7x:2x2x1
jax: 0.10.0
libtpu: 0.0.40
codegen_flags: <defaults>
</compile_context>

<pallas_src>
import numpy as np

import jax
import jax.numpy as jnp
from jax.experimental import pallas as pl
from jax.experimental.pallas import tpu as pltpu

BN_EPS = 1e-5


def _dense_layer_kernel(x_ref, scale_ref, shift_ref, keep_up_ref, keep_dn_ref,
                        wband_ref, out_ref, lhs_ref):
    """Folded-BN -> ReLU -> 3x3 conv (padding=1, no bias) for a tile of images.

    x_ref       : (rows, W*cin)      bf16  activations, (W, C) fused on lanes
    scale_ref   : (1, W*cin)         f32   folded BN scale (gamma * rsqrt(var+eps))
    shift_ref   : (1, W*cin)         f32   folded BN shift (beta - mean*scale)
    keep_up_ref : (rows, 1)          f32   0.0 at each image's TOP row, else 1.0
    keep_dn_ref : (rows, 1)          f32   0.0 at each image's BOTTOM row, else 1.0
    wband_ref   : (3*W*cin, W*cout)  bf16  banded weights, ky=0,1,2 stacked on rows,
                                           horizontal zero-padding folded in
    out_ref     : (rows, W*cout)     bf16  conv output, (W, C) fused on lanes
    lhs_ref     : (rows, 3*W*cin)    bf16  VMEM scratch: im2row slab for the 3 vertical taps
    """
    rows, k = x_ref.shape
    bf16 = jnp.bfloat16

    # --- Folded BatchNorm + ReLU: one f32 FMA + max on the VPU -------------------
    y = jnp.maximum(x_ref[...].astype(jnp.float32) * scale_ref[...] + shift_ref[...],
                    0.0)                                             # (rows, W*cin) f32

    # --- Assemble the (rows, 3*W*cin) im2row slab in VMEM ------------------------
    # Band layout (matches the row order of wband):
    #   lanes [0 , k )  : y[r-1]  (ky=0), zero at every image's top row
    #   lanes [k , 2k)  : y[r]    (ky=1)
    #   lanes [2k, 3k)  : y[r+1]  (ky=2), zero at every image's bottom row
    # Horizontal (W) padding is already folded into the banded weights, so no lane
    # border is needed at all.  The border rows are re-zeroed every step (2 short
    # row stores) so nothing depends on scratch persistence -> megacore-safe.
    band0_src = (y * keep_dn_ref[...]).astype(bf16)  # zero at image bottoms (feeds dest image tops)
    band2_src = (y * keep_up_ref[...]).astype(bf16)  # zero at image tops (feeds dest image bottoms)

    lhs_ref[:, k:2 * k] = y.astype(bf16)
    lhs_ref[0:1, 0:k] = jnp.zeros((1, k), bf16)
    lhs_ref[1:rows, 0:k] = band0_src[0:rows - 1]
    lhs_ref[rows - 1:rows, 2 * k:3 * k] = jnp.zeros((1, k), bf16)
    lhs_ref[0:rows - 1, 2 * k:3 * k] = band2_src[1:rows]

    # --- One MXU matmul per tile: K = 3*W*cin, bf16 operands, f32 accumulation ---
    acc = jnp.dot(lhs_ref[...], wband_ref[...], preferred_element_type=jnp.float32)

    # TODO(synk): at toy widths W*cout < 128 this store is lane-masked; at real
    # DenseNet widths (W*cout >= 128) it is lane-dense automatically.
    out_ref[...] = acc.astype(out_ref.dtype)


def _build_banded_weights(weight, W):
    """(3, 3, Cin, Cout) conv kernel -> (3*W*Cin, W*Cout) banded matrix.

    Horizontal (W-direction) zero-padding is folded in by clipping the kx taps at
    wo=0 and wo=W-1, so the kernel's lhs rows are the *unpadded* (W*Cin) slabs:
        band_ky[wi*Cin + c, wo*Cout + o] = weight[ky, wi-wo+1, c, o]  if 0 <= wi-wo+1 <= 2
    and out[h] = y[h-1] @ band_0 + y[h] @ band_1 + y[h+1] @ band_2.

    TODO(synk): this banded rhs is O(W^2*Cin*Cout) (mostly zeros) and does ~W/3x
    redundant MXU FLOPs; for real DenseNet sizes (W>=32, Cin in the hundreds)
    switch to an im2col (rows, 9*Cin) @ (9*Cin, Cout) GEMM or tile the rhs over a
    W*Cout grid axis.  For the toy 16x16 shapes it is the better layout.
    """
    _, _, cin, cout = weight.shape
    wo = jnp.arange(W)
    bands = []
    for ky in range(3):
        band = jnp.zeros((W, cin, W, cout), weight.dtype)
        for kx in range(3):
            wi = wo + kx - 1                          # input column feeding output column wo
            valid = (wi >= 0) & (wi < W)              # clip taps at the W border (zero-pad semantics)
            wi_c = jnp.clip(wi, 0, W - 1)
            upd = jnp.where(valid[:, None, None], weight[ky, kx][None], 0.0)   # (W, cin, cout)
            band = band.at[wi_c, :, wo, :].add(upd)
        bands.append(band.reshape(W * cin, W * cout))
    return jnp.concatenate(bands, axis=0)             # (3*W*cin, W*cout)


def _vmem_limit_bytes():
    """Generation-aware VMEM budget: ~75% of physical, capped at 100 MiB."""
    try:
        phys = int(pltpu.get_tpu_info().vmem_capacity_bytes)
        return int(min(phys * 3 // 4, 100 * 1024 * 1024))
    except Exception:
        return 32 * 1024 * 1024                       # safe on v5e/v6e/v7x


def _choose_batch_tile(N, H, W, cin, cout, vmem_limit_bytes):
    """Images per grid step: fill the MXU M dimension (~256 rows) within the VMEM budget."""
    def vmem_cost(bt):
        rows = bt * H
        k, k3, n = W * cin, 3 * W * cin, W * cout
        cost = rows * k * 2 * 2            # x block, bf16, double-buffered
        cost += rows * n * 2 * 2           # out block, bf16, double-buffered
        cost += rows * k3 * 2              # im2row scratch, bf16
        cost += rows * (3 * k + n) * 4     # f32 temporaries (y, masked copies, accumulator)
        cost += k3 * n * 2 + 4 * k * 4 + 2 * rows * 4   # weights + scale/shift + masks
        return cost

    bt = max(1, min(N, max(1, 256 // H)))
    while bt > 1 and (N % bt != 0 or vmem_cost(bt) > (vmem_limit_bytes * 3) // 4):
        bt -= 1
    if (bt * H) % 8 != 0:                  # keep the block's sublane dim legal
        bt = N                             # full-array block is always legal
    return bt


def conv_block_apply(x_nhwc, weight, gamma, beta):
    """One conv_block layer: BatchNorm2d (batch stats) -> ReLU -> 3x3 conv (pad=1, no bias)."""
    N, H, W, cin = x_nhwc.shape
    cout = weight.shape[-1]

    # BatchNorm2d training-mode statistics (biased variance), single pass over x
    # (one HBM read), folded into per-channel scale/shift.  E[x^2]-E[x]^2 is safe
    # at these normalized-scale magnitudes (use two-pass/Welford for large ones).
    xf = x_nhwc.astype(jnp.float32)
    m1 = jnp.mean(xf, axis=(0, 1, 2))
    m2 = jnp.mean(xf * xf, axis=(0, 1, 2))
    var = jnp.maximum(m2 - m1 * m1, 0.0)
    scale = gamma * jax.lax.rsqrt(var + BN_EPS)
    shift = beta - m1 * scale

    # Lane-fused (W, C) layout, 2-D (rows = N*H) view for the kernel; bf16 at HBM.
    x2d = x_nhwc.astype(jnp.bfloat16).reshape(N * H, W * cin)
    scale_row = jnp.tile(scale, W).reshape(1, W * cin).astype(jnp.float32)
    shift_row = jnp.tile(shift, W).reshape(1, W * cin).astype(jnp.float32)
    wband = _build_banded_weights(weight, W).astype(jnp.bfloat16)     # (3*W*cin, W*cout)

    vmem_limit = _vmem_limit_bytes()
    bt = _choose_batch_tile(N, H, W, cin, cout, vmem_limit)
    rows = bt * H

    # Per-image vertical boundary masks for the row-shifted bands (1.0 keep / 0.0 zero-pad).
    ridx = np.arange(rows) % H
    keep_up = jnp.asarray((ridx != 0).astype(np.float32).reshape(rows, 1))
    keep_dn = jnp.asarray((ridx != H - 1).astype(np.float32).reshape(rows, 1))

    # Grid-invariant operands: whole-array VMEM residents (loaded once, not
    # double-buffered per grid step).
    vmem_full = pl.BlockSpec(memory_space=pltpu.MemorySpace.VMEM)

    out2d = pl.pallas_call(
        _dense_layer_kernel,
        out_shape=jax.ShapeDtypeStruct((N * H, W * cout), jnp.bfloat16),
        grid=(N // bt,),
        in_specs=[
            pl.BlockSpec((rows, W * cin), lambda i: (i, 0)),   # x tile (bt images)
            vmem_full,                                         # scale
            vmem_full,                                         # shift
            vmem_full,                                         # keep_up
            vmem_full,                                         # keep_dn
            vmem_full,                                         # banded weights
        ],
        out_specs=pl.BlockSpec((rows, W * cout), lambda i: (i, 0)),
        scratch_shapes=[pltpu.VMEM((rows, 3 * W * cin), jnp.bfloat16)],
        compiler_params=pltpu.CompilerParams(
            dimension_semantics=("parallel",),   # batch axis shards across v7x's 2 TCs
            vmem_limit_bytes=vmem_limit,
        ),
    )(x2d, scale_row, shift_row, keep_up, keep_dn, wband)

    return out2d.reshape(N, H, W, cout)


def init_dense_block_params(key, in_channel, out_channel, num_layers):
    """Deterministic synthetic parameters (shapes match the PyTorch module)."""
    params = []
    for i in range(num_layers):
        cin = in_channel + i * out_channel
        key, wkey = jax.random.split(key)
        fan_in = cin * 9
        w = jax.random.normal(wkey, (3, 3, cin, out_channel), jnp.float32)
        w = w * (1.0 / jnp.sqrt(jnp.float32(fan_in)))
        gamma = jnp.ones((cin,), jnp.float32)   # PyTorch BN default weight
        beta = jnp.zeros((cin,), jnp.float32)   # PyTorch BN default bias
        params.append((w, gamma, beta))
    return params


@jax.jit
def dense_block_forward(x_nchw, params):
    # NCHW at the boundary (PyTorch), NHWC inside (channels on the lane axis),
    # carried in bf16 between layers to halve HBM traffic.
    x = jnp.transpose(x_nchw, (0, 2, 3, 1)).astype(jnp.bfloat16)
    for (w, gamma, beta) in params:
        out = conv_block_apply(x, w, gamma, beta)
        # matches torch.cat((out, x), dim=1)
        # TODO(synk): replace the per-layer concat with a preallocated bf16 channel
        # slab updated via input_output_aliases (and fuse the next layer's BN stats
        # into this kernel's epilogue) to remove O(num_layers^2) HBM traffic at
        # real DenseNet sizes.
        x = jnp.concatenate([out, x], axis=-1)
    return jnp.transpose(x, (0, 3, 1, 2)).astype(jnp.float32)


@jax.jit
def dense_block_reference(x_nchw, params):
    """Pure-XLA f32 reference with the exact PyTorch forward semantics."""
    x = x_nchw.astype(jnp.float32)
    for (w, gamma, beta) in params:
        mean = jnp.mean(x, axis=(0, 2, 3), keepdims=True)
        var = jnp.mean(jnp.square(x - mean), axis=(0, 2, 3), keepdims=True)
        y = (x - mean) * jax.lax.rsqrt(var + BN_EPS)
        y = y * gamma.reshape(1, -1, 1, 1) + beta.reshape(1, -1, 1, 1)
        y = jnp.maximum(y, 0.0)
        out = jax.lax.conv_general_dilated(
            y, w, window_strides=(1, 1), padding=((1, 1), (1, 1)),
            dimension_numbers=("NCHW", "HWIO", "NCHW"),
            precision=jax.lax.Precision.HIGHEST)
        x = jnp.concatenate([out, x], axis=1)
    return x


if __name__ == "__main__":
    key = jax.random.PRNGKey(0)
    key, xkey, pkey = jax.random.split(key, 3)

    N, IN_CH, OUT_CH, NUM_LAYERS, H, W = 2, 4, 4, 2, 16, 16

    x = jax.random.normal(xkey, (N, IN_CH, H, W), jnp.float32)
    params = init_dense_block_params(pkey, IN_CH, OUT_CH, NUM_LAYERS)

    y = jax.block_until_ready(dense_block_forward(x, params))
    y_ref = jax.block_until_ready(dense_block_reference(x, params))

    expected_channels = IN_CH + NUM_LAYERS * OUT_CH
    assert y.shape == (N, expected_channels, H, W), y.shape
    assert bool(jnp.all(jnp.isfinite(y)))
    # bf16 HBM boundary + bf16 MXU operands (f32 accumulation) vs the exact f32
    # reference -> relaxed tolerance.
    max_err = float(jnp.max(jnp.abs(y - y_ref)))
    assert max_err < 0.3, max_err

    print("KERNEL_OK")
</pallas_src>

<mosaic_0001>
module attributes {stable_mosaic.version = 11 : i64} {
  func.func @_dense_layer_kernel(%arg0: i32, %arg1: memref<32x64xbf16, #tpu.memory_space<vmem>>, %arg2: memref<1x64xf32, #tpu.memory_space<vmem>>, %arg3: memref<1x64xf32, #tpu.memory_space<vmem>>, %arg4: memref<32x1xf32, #tpu.memory_space<vmem>>, %arg5: memref<32x1xf32, #tpu.memory_space<vmem>>, %arg6: memref<192x64xbf16, #tpu.memory_space<vmem>>, %arg7: memref<32x64xbf16, #tpu.memory_space<vmem>>, %arg8: memref<32x192xbf16, #tpu.memory_space<vmem>>) attributes {dimension_semantics = [#tpu.dimension_semantics<parallel>], iteration_bounds = array<i64: 1>, scalar_prefetch = 0 : i64, scratch_operands = 1 : i64, tpu.core_type = #tpu.core_type<tc>, window_params = [{transform_indices = @transform_0, window_bounds = array<i64: 32, 64>}, {pipeline_mode = #tpu.pipeline_mode<synchronous>, transform_indices = @transform_1, window_bounds = array<i64: 1, 64>}, {pipeline_mode = #tpu.pipeline_mode<synchronous>, transform_indices = @transform_2, window_bounds = array<i64: 1, 64>}, {pipeline_mode = #tpu.pipeline_mode<synchronous>, transform_indices = @transform_3, window_bounds = array<i64: 32, 1>}, {pipeline_mode = #tpu.pipeline_mode<synchronous>, transform_indices = @transform_4, window_bounds = array<i64: 32, 1>}, {pipeline_mode = #tpu.pipeline_mode<synchronous>, transform_indices = @transform_5, window_bounds = array<i64: 192, 64>}, {transform_indices = @transform_6, window_bounds = array<i64: 32, 64>}]} {
    %c0 = arith.constant 0 : index
    %c0_0 = arith.constant 0 : index
    %0 = vector.load %arg1[%c0, %c0_0] : memref<32x64xbf16, #tpu.memory_space<vmem>>, vector<32x64xbf16>
    %1 = arith.extf %0 : vector<32x64xbf16> to vector<32x64xf32>
    %c0_1 = arith.constant 0 : index
    %c0_2 = arith.constant 0 : index
    %2 = vector.load %arg2[%c0_1, %c0_2] : memref<1x64xf32, #tpu.memory_space<vmem>>, vector<1x64xf32>
    %3 = vector.broadcast %2 : vector<1x64xf32> to vector<32x64xf32>
    %4 = arith.mulf %1, %3 : vector<32x64xf32>
    %c0_3 = arith.constant 0 : index
    %c0_4 = arith.constant 0 : index
    %5 = vector.load %arg3[%c0_3, %c0_4] : memref<1x64xf32, #tpu.memory_space<vmem>>, vector<1x64xf32>
    %6 = vector.broadcast %5 : vector<1x64xf32> to vector<32x64xf32>
    %7 = arith.addf %4, %6 : vector<32x64xf32>
    %cst = arith.constant 0.000000e+00 : f32
    %8 = vector.broadcast %cst : f32 to vector<32x64xf32>
    %9 = arith.maximumf %7, %8 : vector<32x64xf32>
    %c0_5 = arith.constant 0 : index
    %c0_6 = arith.constant 0 : index
    %10 = vector.load %arg5[%c0_5, %c0_6] : memref<32x1xf32, #tpu.memory_space<vmem>>, vector<32x1xf32>
    %11 = vector.broadcast %10 : vector<32x1xf32> to vector<32x64xf32>
    %12 = arith.mulf %9, %11 : vector<32x64xf32>
    %13 = arith.truncf %12 : vector<32x64xf32> to vector<32x64xbf16>
    %c0_7 = arith.constant 0 : index
    %c0_8 = arith.constant 0 : index
    %14 = vector.load %arg4[%c0_7, %c0_8] : memref<32x1xf32, #tpu.memory_space<vmem>>, vector<32x1xf32>
    %15 = vector.broadcast %14 : vector<32x1xf32> to vector<32x64xf32>
    %16 = arith.mulf %9, %15 : vector<32x64xf32>
    %17 = arith.truncf %16 : vector<32x64xf32> to vector<32x64xbf16>
    %18 = arith.truncf %9 : vector<32x64xf32> to vector<32x64xbf16>
    %c0_9 = arith.constant 0 : index
    %c64 = arith.constant 64 : index
    %19 = vector.load %arg8[%c0_9, %c64] : memref<32x192xbf16, #tpu.memory_space<vmem>>, vector<32x64xbf16>
    tpu.vector_store %arg8[%c0_9, %c64], %18 {strides = array<i32>} : memref<32x192xbf16, #tpu.memory_space<vmem>>, vector<32x64xbf16>,
    %cst_10 = arith.constant 0.000000e+00 : bf16
    %20 = vector.broadcast %cst_10 : bf16 to vector<1x64xbf16>
    %c0_11 = arith.constant 0 : index
    %c0_12 = arith.constant 0 : index
    %21 = vector.load %arg8[%c0_11, %c0_12] : memref<32x192xbf16, #tpu.memory_space<vmem>>, vector<1x64xbf16>
    tpu.vector_store %arg8[%c0_11, %c0_12], %20 {strides = array<i32>} : memref<32x192xbf16, #tpu.memory_space<vmem>>, vector<1x64xbf16>,
    %22 = vector.extract_strided_slice %13 {offsets = [0, 0], sizes = [31, 64], strides = [1, 1]} : vector<32x64xbf16> to vector<31x64xbf16>
    %c1 = arith.constant 1 : index
    %c0_13 = arith.constant 0 : index
    %23 = vector.load %arg8[%c1, %c0_13] : memref<32x192xbf16, #tpu.memory_space<vmem>>, vector<31x64xbf16>
    tpu.vector_store %arg8[%c1, %c0_13], %22 {strides = array<i32>} : memref<32x192xbf16, #tpu.memory_space<vmem>>, vector<31x64xbf16>,
    %cst_14 = arith.constant 0.000000e+00 : bf16
    %24 = vector.broadcast %cst_14 : bf16 to vector<1x64xbf16>
    %c31 = arith.constant 31 : index
    %c128 = arith.constant 128 : index
    %25 = vector.load %arg8[%c31, %c128] : memref<32x192xbf16, #tpu.memory_space<vmem>>, vector<1x64xbf16>
    tpu.vector_store %arg8[%c31, %c128], %24 {strides = array<i32>} : memref<32x192xbf16, #tpu.memory_space<vmem>>, vector<1x64xbf16>,
    %26 = vector.extract_strided_slice %17 {offsets = [1, 0], sizes = [31, 64], strides = [1, 1]} : vector<32x64xbf16> to vector<31x64xbf16>
    %c0_15 = arith.constant 0 : index
    %c128_16 = arith.constant 128 : index
    %27 = vector.load %arg8[%c0_15, %c128_16] : memref<32x192xbf16, #tpu.memory_space<vmem>>, vector<31x64xbf16>
    tpu.vector_store %arg8[%c0_15, %c128_16], %26 {strides = array<i32>} : memref<32x192xbf16, #tpu.memory_space<vmem>>, vector<31x64xbf16>,
    %c0_17 = arith.constant 0 : index
    %c0_18 = arith.constant 0 : index
    %28 = vector.load %arg8[%c0_17, %c0_18] : memref<32x192xbf16, #tpu.memory_space<vmem>>, vector<32x192xbf16>
    %c0_19 = arith.constant 0 : index
    %c0_20 = arith.constant 0 : index
    %29 = vector.load %arg6[%c0_19, %c0_20] : memref<192x64xbf16, #tpu.memory_space<vmem>>, vector<192x64xbf16>
    %cst_21 = arith.constant dense<0.000000e+00> : vector<32x64xf32>
    %30 = tpu.matmul %28, %29, %cst_21 {dimension_numbers = #tpu.dot_dimension_numbers<[1], [0], [0], [1], [0, 0, 1, 1], [], []>} : vector<32x192xbf16>, vector<192x64xbf16>, vector<32x64xf32> -> vector<32x64xf32>
    %31 = arith.truncf %30 : vector<32x64xf32> to vector<32x64xbf16>
    %c0_22 = arith.constant 0 : index
    %c0_23 = arith.constant 0 : index
    %32 = vector.load %arg7[%c0_22, %c0_23] : memref<32x64xbf16, #tpu.memory_space<vmem>>, vector<32x64xbf16>
    tpu.vector_store %arg7[%c0_22, %c0_23], %31 {strides = array<i32>} : memref<32x64xbf16, #tpu.memory_space<vmem>>, vector<32x64xbf16>,
    return
  }
  func.func @transform_0(%arg0: i32) -> (i32, i32) {
    %c0_i32 = arith.constant 0 : i32
    %c0_i32_0 = arith.constant 0 : i32
    return %arg0, %c0_i32 : i32, i32
  }
  func.func @transform_1(%arg0: i32) -> (i32, i32) {
    %c0_i32 = arith.constant 0 : i32
    %c0_i32_0 = arith.constant 0 : i32
    %c0_i32_1 = arith.constant 0 : i32
    return %c0_i32, %c0_i32_0 : i32, i32
  }
  func.func @transform_2(%arg0: i32) -> (i32, i32) {
    %c0_i32 = arith.constant 0 : i32
    %c0_i32_0 = arith.constant 0 : i32
    %c0_i32_1 = arith.constant 0 : i32
    return %c0_i32, %c0_i32_0 : i32, i32
  }
  func.func @transform_3(%arg0: i32) -> (i32, i32) {
    %c0_i32 = arith.constant 0 : i32
    %c0_i32_0 = arith.constant 0 : i32
    %c0_i32_1 = arith.constant 0 : i32
    return %c0_i32, %c0_i32_0 : i32, i32
  }
  func.func @transform_4(%arg0: i32) -> (i32, i32) {
    %c0_i32 = arith.constant 0 : i32
    %c0_i32_0 = arith.constant 0 : i32
    %c0_i32_1 = arith.constant 0 : i32
    return %c0_i32, %c0_i32_0 : i32, i32
  }
  func.func @transform_5(%arg0: i32) -> (i32, i32) {
    %c0_i32 = arith.constant 0 : i32
    %c0_i32_0 = arith.constant 0 : i32
    %c0_i32_1 = arith.constant 0 : i32
    return %c0_i32, %c0_i32_0 : i32, i32
  }
  func.func @transform_6(%arg0: i32) -> (i32, i32) {
    %c0_i32 = arith.constant 0 : i32
    %c0_i32_0 = arith.constant 0 : i32
    return %arg0, %c0_i32 : i32, i32
  }
}

module attributes {stable_mosaic.version = 11 : i64} {
  func.func @_dense_layer_kernel(%arg0: i32, %arg1: memref<32x128xbf16, #tpu.memory_space<vmem>>, %arg2: memref<1x128xf32, #tpu.memory_space<vmem>>, %arg3: memref<1x128xf32, #tpu.memory_space<vmem>>, %arg4: memref<32x1xf32, #tpu.memory_space<vmem>>, %arg5: memref<32x1xf32, #tpu.memory_space<vmem>>, %arg6: memref<384x64xbf16, #tpu.memory_space<vmem>>, %arg7: memref<32x64xbf16, #tpu.memory_space<vmem>>, %arg8: memref<32x384xbf16, #tpu.memory_space<vmem>>) attributes {dimension_semantics = [#tpu.dimension_semantics<parallel>], iteration_bounds = array<i64: 1>, scalar_prefetch = 0 : i64, scratch_operands = 1 : i64, tpu.core_type = #tpu.core_type<tc>, window_params = [{transform_indices = @transform_0, window_bounds = array<i64: 32, 128>}, {pipeline_mode = #tpu.pipeline_mode<synchronous>, transform_indices = @transform_1, window_bounds = array<i64: 1, 128>}, {pipeline_mode = #tpu.pipeline_mode<synchronous>, transform_indices = @transform_2, window_bounds = array<i64: 1, 128>}, {pipeline_mode = #tpu.pipeline_mode<synchronous>, transform_indices = @transform_3, window_bounds = array<i64: 32, 1>}, {pipeline_mode = #tpu.pipeline_mode<synchronous>, transform_indices = @transform_4, window_bounds = array<i64: 32, 1>}, {pipeline_mode = #tpu.pipeline_mode<synchronous>, transform_indices = @transform_5, window_bounds = array<i64: 384, 64>}, {transform_indices = @transform_6, window_bounds = array<i64: 32, 64>}]} {
    %c0 = arith.constant 0 : index
    %c0_0 = arith.constant 0 : index
    %0 = vector.load %arg1[%c0, %c0_0] : memref<32x128xbf16, #tpu.memory_space<vmem>>, vector<32x128xbf16>
    %1 = arith.extf %0 : vector<32x128xbf16> to vector<32x128xf32>
    %c0_1 = arith.constant 0 : index
    %c0_2 = arith.constant 0 : index
    %2 = vector.load %arg2[%c0_1, %c0_2] : memref<1x128xf32, #tpu.memory_space<vmem>>, vector<1x128xf32>
    %3 = vector.broadcast %2 : vector<1x128xf32> to vector<32x128xf32>
    %4 = arith.mulf %1, %3 : vector<32x128xf32>
    %c0_3 = arith.constant 0 : index
    %c0_4 = arith.constant 0 : index
    %5 = vector.load %arg3[%c0_3, %c0_4] : memref<1x128xf32, #tpu.memory_space<vmem>>, vector<1x128xf32>
    %6 = vector.broadcast %5 : vector<1x128xf32> to vector<32x128xf32>
    %7 = arith.addf %4, %6 : vector<32x128xf32>
    %cst = arith.constant 0.000000e+00 : f32
    %8 = vector.broadcast %cst : f32 to vector<32x128xf32>
    %9 = arith.maximumf %7, %8 : vector<32x128xf32>
    %c0_5 = arith.constant 0 : index
    %c0_6 = arith.constant 0 : index
    %10 = vector.load %arg5[%c0_5, %c0_6] : memref<32x1xf32, #tpu.memory_space<vmem>>, vector<32x1xf32>
    %11 = vector.broadcast %10 : vector<32x1xf32> to vector<32x128xf32>
    %12 = arith.mulf %9, %11 : vector<32x128xf32>
    %13 = arith.truncf %12 : vector<32x128xf32> to vector<32x128xbf16>
    %c0_7 = arith.constant 0 : index
    %c0_8 = arith.constant 0 : index
    %14 = vector.load %arg4[%c0_7, %c0_8] : memref<32x1xf32, #tpu.memory_space<vmem>>, vector<32x1xf32>
    %15 = vector.broadcast %14 : vector<32x1xf32> to vector<32x128xf32>
    %16 = arith.mulf %9, %15 : vector<32x128xf32>
    %17 = arith.truncf %16 : vector<32x128xf32> to vector<32x128xbf16>
    %18 = arith.truncf %9 : vector<32x128xf32> to vector<32x128xbf16>
    %c0_9 = arith.constant 0 : index
    %c128 = arith.constant 128 : index
    %19 = vector.load %arg8[%c0_9, %c128] : memref<32x384xbf16, #tpu.memory_space<vmem>>, vector<32x128xbf16>
    tpu.vector_store %arg8[%c0_9, %c128], %18 {strides = array<i32>} : memref<32x384xbf16, #tpu.memory_space<vmem>>, vector<32x128xbf16>,
    %cst_10 = arith.constant 0.000000e+00 : bf16
    %20 = vector.broadcast %cst_10 : bf16 to vector<1x128xbf16>
    %c0_11 = arith.constant 0 : index
    %c0_12 = arith.constant 0 : index
    %21 = vector.load %arg8[%c0_11, %c0_12] : memref<32x384xbf16, #tpu.memory_space<vmem>>, vector<1x128xbf16>
    tpu.vector_store %arg8[%c0_11, %c0_12], %20 {strides = array<i32>} : memref<32x384xbf16, #tpu.memory_space<vmem>>, vector<1x128xbf16>,
    %22 = vector.extract_strided_slice %13 {offsets = [0, 0], sizes = [31, 128], strides = [1, 1]} : vector<32x128xbf16> to vector<31x128xbf16>
    %c1 = arith.constant 1 : index
    %c0_13 = arith.constant 0 : index
    %23 = vector.load %arg8[%c1, %c0_13] : memref<32x384xbf16, #tpu.memory_space<vmem>>, vector<31x128xbf16>
    tpu.vector_store %arg8[%c1, %c0_13], %22 {strides = array<i32>} : memref<32x384xbf16, #tpu.memory_space<vmem>>, vector<31x128xbf16>,
    %cst_14 = arith.constant 0.000000e+00 : bf16
    %24 = vector.broadcast %cst_14 : bf16 to vector<1x128xbf16>
    %c31 = arith.constant 31 : index
    %c256 = arith.constant 256 : index
    %25 = vector.load %arg8[%c31, %c256] : memref<32x384xbf16, #tpu.memory_space<vmem>>, vector<1x128xbf16>
    tpu.vector_store %arg8[%c31, %c256], %24 {strides = array<i32>} : memref<32x384xbf16, #tpu.memory_space<vmem>>, vector<1x128xbf16>,
    %26 = vector.extract_strided_slice %17 {offsets = [1, 0], sizes = [31, 128], strides = [1, 1]} : vector<32x128xbf16> to vector<31x128xbf16>
    %c0_15 = arith.constant 0 : index
    %c256_16 = arith.constant 256 : index
    %27 = vector.load %arg8[%c0_15, %c256_16] : memref<32x384xbf16, #tpu.memory_space<vmem>>, vector<31x128xbf16>
    tpu.vector_store %arg8[%c0_15, %c256_16], %26 {strides = array<i32>} : memref<32x384xbf16, #tpu.memory_space<vmem>>, vector<31x128xbf16>,
    %c0_17 = arith.constant 0 : index
    %c0_18 = arith.constant 0 : index
    %28 = vector.load %arg8[%c0_17, %c0_18] : memref<32x384xbf16, #tpu.memory_space<vmem>>, vector<32x384xbf16>
    %c0_19 = arith.constant 0 : index
    %c0_20 = arith.constant 0 : index
    %29 = vector.load %arg6[%c0_19, %c0_20] : memref<384x64xbf16, #tpu.memory_space<vmem>>, vector<384x64xbf16>
    %cst_21 = arith.constant dense<0.000000e+00> : vector<32x64xf32>
    %30 = tpu.matmul %28, %29, %cst_21 {dimension_numbers = #tpu.dot_dimension_numbers<[1], [0], [0], [1], [0, 0, 1, 1], [], []>} : vector<32x384xbf16>, vector<384x64xbf16>, vector<32x64xf32> -> vector<32x64xf32>
    %31 = arith.truncf %30 : vector<32x64xf32> to vector<32x64xbf16>
    %c0_22 = arith.constant 0 : index
    %c0_23 = arith.constant 0 : index
    %32 = vector.load %arg7[%c0_22, %c0_23] : memref<32x64xbf16, #tpu.memory_space<vmem>>, vector<32x64xbf16>
    tpu.vector_store %arg7[%c0_22, %c0_23], %31 {strides = array<i32>} : memref<32x64xbf16, #tpu.memory_space<vmem>>, vector<32x64xbf16>,
    return
  }
  func.func @transform_0(%arg0: i32) -> (i32, i32) {
    %c0_i32 = arith.constant 0 : i32
    %c0_i32_0 = arith.constant 0 : i32
    return %arg0, %c0_i32 : i32, i32
  }
  func.func @transform_1(%arg0: i32) -> (i32, i32) {
    %c0_i32 = arith.constant 0 : i32
    %c0_i32_0 = arith.constant 0 : i32
    %c0_i32_1 = arith.constant 0 : i32
    return %c0_i32, %c0_i32_0 : i32, i32
  }
  func.func @transform_2(%arg0: i32) -> (i32, i32) {
    %c0_i32 = arith.constant 0 : i32
    %c0_i32_0 = arith.constant 0 : i32
    %c0_i32_1 = arith.constant 0 : i32
    return %c0_i32, %c0_i32_0 : i32, i32
  }
  func.func @transform_3(%arg0: i32) -> (i32, i32) {
    %c0_i32 = arith.constant 0 : i32
    %c0_i32_0 = arith.constant 0 : i32
    %c0_i32_1 = arith.constant 0 : i32
    return %c0_i32, %c0_i32_0 : i32, i32
  }
  func.func @transform_4(%arg0: i32) -> (i32, i32) {
    %c0_i32 = arith.constant 0 : i32
    %c0_i32_0 = arith.constant 0 : i32
    %c0_i32_1 = arith.constant 0 : i32
    return %c0_i32, %c0_i32_0 : i32, i32
  }
  func.func @transform_5(%arg0: i32) -> (i32, i32) {
    %c0_i32 = arith.constant 0 : i32
    %c0_i32_0 = arith.constant 0 : i32
    %c0_i32_1 = arith.constant 0 : i32
    return %c0_i32, %c0_i32_0 : i32, i32
  }
  func.func @transform_6(%arg0: i32) -> (i32, i32) {
    %c0_i32 = arith.constant 0 : i32
    %c0_i32_0 = arith.constant 0 : i32
    return %arg0, %c0_i32 : i32, i32
  }
}

</mosaic_0001>

<llo_original>
// kernel: tile.24
$region0: #{tile.24}
  %s0 = inlined_call_operand.vmem [shape: f32[16,4], index: 0, kind: input, shape index: {}]
  %s1 = inlined_call_operand.vmem [shape: f32[1,64], index: 1, kind: output, shape index: {}]
  $region1: #{tile.24} parent=0
    #allocation0 [shape = 'u8[4096]{0}', space=vmem, size = 0x1000, scoped, tag = 'scoped mem for output reshape']
    %v2 = vld [vmem:[%s0] sm:$0x1]
    %vm3 = vcmask 31744
    %4 = vst.msk [vmem:[#allocation0] sm:$0x1] %vm3, %v2
    %s5 = scalar_lea.vmem %s0, 15
    %v6 = vld [vmem:[%s5] sm:$0x1]
    %7 = vrot.lane.b32.xlu0 %v6, 60
    %v8 = vpop.permute.xlu0 %7
    %vm9 = vcmask 523744
    %10 = vst.msk [vmem:[#allocation0] sm:$0x1] %vm9, %v8
    %s11 = scalar_lea.vmem %s0, 14
    %v12 = vld [vmem:[%s11] sm:$0x1]
    %13 = vrot.lane.b32.xlu0 %v12, 56
    %v14 = vpop.permute.xlu0 %13
    %vm15 = vcmask 490944
    %16 = vst.msk [vmem:[#allocation0] sm:$0x1] %vm15, %v14
    %s17 = scalar_lea.vmem %s0, 13
    %v18 = vld [vmem:[%s17] sm:$0x1]
    %19 = vrot.lane.b32.xlu0 %v18, 52
    %v20 = vpop.permute.xlu0 %19
    %vm21 = vcmask 458144
    %22 = vst.msk [vmem:[#allocation0] sm:$0x1] %vm21, %v20
    %s23 = scalar_lea.vmem %s0, 12
    %v24 = vld [vmem:[%s23] sm:$0x1]
    %25 = vrot.lane.b32.xlu0 %v24, 48
    %v26 = vpop.permute.xlu0 %25
    %vm27 = vcmask 425344
    %28 = vst.msk [vmem:[#allocation0] sm:$0x1] %vm27, %v26
    %s29 = scalar_lea.vmem %s0, 11
    %v30 = vld [vmem:[%s29] sm:$0x1]
    %31 = vrot.lane.b32.xlu0 %v30, 44
    %v32 = vpop.permute.xlu0 %31
    %vm33 = vcmask 392544
    %34 = vst.msk [vmem:[#allocation0] sm:$0x1] %vm33, %v32
    %s35 = scalar_lea.vmem %s0, 10
    %v36 = vld [vmem:[%s35] sm:$0x1]
    %37 = vrot.lane.b32.xlu0 %v36, 40
    %v38 = vpop.permute.xlu0 %37
    %vm39 = vcmask 359744
    %40 = vst.msk [vmem:[#allocation0] sm:$0x1] %vm39, %v38
    %s41 = scalar_lea.vmem %s0, 9
    %v42 = vld [vmem:[%s41] sm:$0x1]
    %43 = vrot.lane.b32.xlu0 %v42, 36
    %v44 = vpop.permute.xlu0 %43
    %vm45 = vcmask 326944
    %46 = vst.msk [vmem:[#allocation0] sm:$0x1] %vm45, %v44
    %s47 = scalar_lea.vmem %s0, 8
    %v48 = vld [vmem:[%s47] sm:$0x1]
    %49 = vrot.lane.b32.xlu0 %v48, 32
    %v50 = vpop.permute.xlu0 %49
    %vm51 = vcmask 294144
    %52 = vst.msk [vmem:[#allocation0] sm:$0x1] %vm51, %v50
    %s53 = scalar_lea.vmem %s0, 7
    %v54 = vld [vmem:[%s53] sm:$0x1]
    %55 = vrot.lane.b32.xlu0 %v54, 28
    %v56 = vpop.permute.xlu0 %55
    %vm57 = vcmask 261344
    %58 = vst.msk [vmem:[#allocation0] sm:$0x1] %vm57, %v56
    %s59 = scalar_lea.vmem %s0, 6
    %v60 = vld [vmem:[%s59] sm:$0x1]
    %61 = vrot.lane.b32.xlu0 %v60, 24
    %v62 = vpop.permute.xlu0 %61
    %vm63 = vcmask 228544
    %64 = vst.msk [vmem:[#allocation0] sm:$0x1] %vm63, %v62
    %s65 = scalar_lea.vmem %s0, 5
    %v66 = vld [vmem:[%s65] sm:$0x1]
    %67 = vrot.lane.b32.xlu0 %v66, 20
    %v68 = vpop.permute.xlu0 %67
    %vm69 = vcmask 195744
    %70 = vst.msk [vmem:[#allocation0] sm:$0x1] %vm69, %v68
    %s71 = scalar_lea.vmem %s0, 4
    %v72 = vld [vmem:[%s71] sm:$0x1]
    %73 = vrot.lane.b32.xlu0 %v72, 16
    %v74 = vpop.permute.xlu0 %73
    %vm75 = vcmask 162944
    %76 = vst.msk [vmem:[#allocation0] sm:$0x1] %vm75, %v74
    %s77 = scalar_lea.vmem %s0, 3
    %v78 = vld [vmem:[%s77] sm:$0x1]
    %79 = vrot.lane.b32.xlu0 %v78, 12
    %v80 = vpop.permute.xlu0 %79
    %vm81 = vcmask 130144
    %82 = vst.msk [vmem:[#allocation0] sm:$0x1] %vm81, %v80
    %s83 = scalar_lea.vmem %s0, 2
    %v84 = vld [vmem:[%s83] sm:$0x1]
    %85 = vrot.lane.b32.xlu0 %v84, 8
    %v86 = vpop.permute.xlu0 %85
    %vm87 = vcmask 97344
    %88 = vst.msk [vmem:[#allocation0] sm:$0x1] %vm87, %v86
    %s89 = scalar_lea.vmem %s0, 1
    %v90 = vld [vmem:[%s89] sm:$0x1]
    %91 = vrot.lane.b32.xlu0 %v90, 4
    %v92 = vpop.permute.xlu0 %91
    %vm93 = vcmask 64544
    %94 = vst.msk [vmem:[#allocation0] sm:$0x1] %vm93, %v92
    %s96 = sshllo.u32 0, 1
    %v98 = vld [vmem:[#allocation0] sm:%s96]
    %s99 = sshllo.u32 0, 1
    %100 = vst [vmem:[%s1] sm:%s99] %v98

// kernel: tile.23
$region0: #{tile.23}
  #allocation0 [shape = 's32[1]{0}', space=sflag, size = 0x4, scoped, tag = 'scoped memory for tile.23']
  %s0 = inlined_call_operand.vmem [shape: f32[4], index: 0, kind: input, shape index: {}]
  %s1 = inlined_call_operand.vmem [shape: f32[16,4], index: 1, kind: output, shape index: {}]
  // Predicated region
  $region2: #{tile.23} parent=0 // pred_check
    _
  $region3: #{tile.23} parent=0 // pred_check_branch
    %3 = sbr.rel (0) target = $region5
  $region4: #{tile.23} parent=0 // pred_region
    _
  $region5: #{tile.23} parent=0 // pred_fallthru
    _
  %v4 = vld [vmem:[%s0] ss:$0 sm:$0xff]
  %5 = vst [vmem:[%s1] sm:$0xff] %v4
  %s6 = scalar_lea.vmem %s1, 8
  %7 = vst [vmem:[%s6] sm:$0xff] %v4

// kernel: tile.33
$region0: #{tile.33}
  #allocation0 [shape = 's32[1]{0}', space=sflag, size = 0x4, scoped, tag = 'scoped memory for tile.33']
  %s0 = inlined_call_operand.vmem [shape: f32[8], index: 0, kind: input, shape index: {}]
  %s1 = inlined_call_operand.vmem [shape: f32[16,8], index: 1, kind: output, shape index: {}]
  // Predicated region
  $region2: #{tile.33} parent=0 // pred_check
    _
  $region3: #{tile.33} parent=0 // pred_check_branch
    %3 = sbr.rel (0) target = $region5
  $region4: #{tile.33} parent=0 // pred_region
    _
  $region5: #{tile.33} parent=0 // pred_fallthru
    _
  %v4 = vld [vmem:[%s0] ss:$0 sm:$0xff]
  %5 = vst [vmem:[%s1] sm:$0xff] %v4
  %s6 = scalar_lea.vmem %s1, 8
  %7 = vst [vmem:[%s6] sm:$0xff] %v4

// kernel: tile.34
$region0: #{tile.34}
  %s0 = inlined_call_operand.vmem [shape: f32[16,8], index: 0, kind: input, shape index: {}]
  %s1 = inlined_call_operand.vmem [shape: f32[1,128], index: 1, kind: output, shape index: {}]
  $region1: #{tile.34} parent=0
    #allocation0 [shape = 'u8[4096]{0}', space=vmem, size = 0x1000, scoped, tag = 'scoped mem for output reshape']
    %v2 = vld [vmem:[%s0] sm:$0x1]
    %vm3 = vcmask 64512
    %4 = vst.msk [vmem:[#allocation0] sm:$0x1] %vm3, %v2
    %s5 = scalar_lea.vmem %s0, 15
    %v6 = vld [vmem:[%s5] sm:$0x1]
    %7 = vrot.lane.b32.xlu0 %v6, 120
    %v8 = vpop.permute.xlu0 %7
    %vm9 = vcmask 1048512
    %10 = vst.msk [vmem:[#allocation0] sm:$0x1] %vm9, %v8
    %s11 = scalar_lea.vmem %s0, 14
    %v12 = vld [vmem:[%s11] sm:$0x1]
    %13 = vrot.lane.b32.xlu0 %v12, 112
    %v14 = vpop.permute.xlu0 %13
    %vm15 = vcmask 982912
    %16 = vst.msk [vmem:[#allocation0] sm:$0x1] %vm15, %v14
    %s17 = scalar_lea.vmem %s0, 13
    %v18 = vld [vmem:[%s17] sm:$0x1]
    %19 = vrot.lane.b32.xlu0 %v18, 104
    %v20 = vpop.permute.xlu0 %19
    %vm21 = vcmask 917312
    %22 = vst.msk [vmem:[#allocation0] sm:$0x1] %vm21, %v20
    %s23 = scalar_lea.vmem %s0, 12
    %v24 = vld [vmem:[%s23] sm:$0x1]
    %25 = vrot.lane.b32.xlu0 %v24, 96
    %v26 = vpop.permute.xlu0 %25
    %vm27 = vcmask 851712
    %28 = vst.msk [vmem:[#allocation0] sm:$0x1] %vm27, %v26
    %s29 = scalar_lea.vmem %s0, 11
    %v30 = vld [vmem:[%s29] sm:$0x1]
    %31 = vrot.lane.b32.xlu0 %v30, 88
    %v32 = vpop.permute.xlu0 %31
    %vm33 = vcmask 786112
    %34 = vst.msk [vmem:[#allocation0] sm:$0x1] %vm33, %v32
    %s35 = scalar_lea.vmem %s0, 10
    %v36 = vld [vmem:[%s35] sm:$0x1]
    %37 = vrot.lane.b32.xlu0 %v36, 80
    %v38 = vpop.permute.xlu0 %37
    %vm39 = vcmask 720512
    %40 = vst.msk [vmem:[#allocation0] sm:$0x1] %vm39, %v38
    %s41 = scalar_lea.vmem %s0, 9
    %v42 = vld [vmem:[%s41] sm:$0x1]
    %43 = vrot.lane.b32.xlu0 %v42, 72
    %v44 = vpop.permute.xlu0 %43
    %vm45 = vcmask 654912
    %46 = vst.msk [vmem:[#allocation0] sm:$0x1] %vm45, %v44
    %s47 = scalar_lea.vmem %s0, 8
    %v48 = vld [vmem:[%s47] sm:$0x1]
    %49 = vrot.lane.b32.xlu0 %v48, 64
    %v50 = vpop.permute.xlu0 %49
    %vm51 = vcmask 589312
    %52 = vst.msk [vmem:[#allocation0] sm:$0x1] %vm51, %v50
    %s53 = scalar_lea.vmem %s0, 7
    %v54 = vld [vmem:[%s53] sm:$0x1]
    %55 = vrot.lane.b32.xlu0 %v54, 56
    %v56 = vpop.permute.xlu0 %55
    %vm57 = vcmask 523712
    %58 = vst.msk [vmem:[#allocation0] sm:$0x1] %vm57, %v56
    %s59 = scalar_lea.vmem %s0, 6
    %v60 = vld [vmem:[%s59] sm:$0x1]
    %61 = vrot.lane.b32.xlu0 %v60, 48
    %v62 = vpop.permute.xlu0 %61
    %vm63 = vcmask 458112
    %64 = vst.msk [vmem:[#allocation0] sm:$0x1] %vm63, %v62
    %s65 = scalar_lea.vmem %s0, 5
    %v66 = vld [vmem:[%s65] sm:$0x1]
    %67 = vrot.lane.b32.xlu0 %v66, 40
    %v68 = vpop.permute.xlu0 %67
    %vm69 = vcmask 392512
    %70 = vst.msk [vmem:[#allocation0] sm:$0x1] %vm69, %v68
    %s71 = scalar_lea.vmem %s0, 4
    %v72 = vld [vmem:[%s71] sm:$0x1]
    %73 = vrot.lane.b32.xlu0 %v72, 32
    %v74 = vpop.permute.xlu0 %73
    %vm75 = vcmask 326912
    %76 = vst.msk [vmem:[#allocation0] sm:$0x1] %vm75, %v74
    %s77 = scalar_lea.vmem %s0, 3
    %v78 = vld [vmem:[%s77] sm:$0x1]
    %79 = vrot.lane.b32.xlu0 %v78, 24
    %v80 = vpop.permute.xlu0 %79
    %vm81 = vcmask 261312
    %82 = vst.msk [vmem:[#allocation0] sm:$0x1] %vm81, %v80
    %s83 = scalar_lea.vmem %s0, 2
    %v84 = vld [vmem:[%s83] sm:$0x1]
    %85 = vrot.lane.b32.xlu0 %v84, 16
    %v86 = vpop.permute.xlu0 %85
    %vm87 = vcmask 195712
    %88 = vst.msk [vmem:[#allocation0] sm:$0x1] %vm87, %v86
    %s89 = scalar_lea.vmem %s0, 1
    %v90 = vld [vmem:[%s89] sm:$0x1]
    %91 = vrot.lane.b32.xlu0 %v90, 8
    %v92 = vpop.permute.xlu0 %91
    %vm93 = vcmask 130112
    %94 = vst.msk [vmem:[#allocation0] sm:$0x1] %vm93, %v92
    %s96 = sshllo.u32 0, 1
    %v98 = vld [vmem:[#allocation0] sm:%s96]
    %s99 = sshllo.u32 0, 1
    %100 = vst [vmem:[%s1] sm:%s99] %v98

// kernel: dense_block_forward.2
$region0: #{dense_block_forward.2}
  #allocation0 [shape = 'u32[]', space=smem, size = 0x4, offset = 0x4, fixed_abs, tag = 'smem constant byte address 0x4 - core index']
  #allocation1 [shape = 'u32[144,128]{1,0:T(1,128)}', space=vmem, size = 0x12000, scoped, tag = 'internal scratch']
  #allocation2 [shape = 'bf16[32,192]{1,0:T(16,128)(2,1)}', space=vmem, size = 0x4000, scoped, tag = 'scratch operand']
  %s0 = inlined_call_operand.vmem [shape: bf16[32,64], index: 0, kind: input, shape index: {}]
  %s1 = inlined_call_operand.vmem [shape: f32[1,64], index: 1, kind: input, shape index: {}]
  %s2 = inlined_call_operand.vmem [shape: f32[1,64], index: 2, kind: input, shape index: {}]
  %s3 = inlined_call_operand.vmem [shape: f32[32,1], index: 3, kind: input, shape index: {}]
  %s4 = inlined_call_operand.vmem [shape: f32[32,1], index: 4, kind: input, shape index: {}]
  %s5 = inlined_call_operand.vmem [shape: bf16[192,64], index: 5, kind: input, shape index: {}]
  %s6 = inlined_call_operand.vmem [shape: bf16[32,64], index: 6, kind: output, shape index: {}]
  %s7 = sld [smem:[#allocation0]]
  $region34: #{dense_block_forward.2} parent=0
    _
  %s9 = ssub.s32 1, %s7
  %s10 = scalar_select 0, %s9, %s7
  // Predicated region
  $region2: #{dense_block_forward.2} parent=0 // pred_check
    _
  $region3: #{dense_block_forward.2} parent=0 // pred_check_branch
    %12 = sbr.rel (0) target = $region5
  $region4: #{dense_block_forward.2} parent=0 // pred_region
    _
  $region5: #{dense_block_forward.2} parent=0 // pred_fallthru
    _
  // Predicated region
  $region6: #{dense_block_forward.2} parent=0 // pred_check
    _
  $region7: #{dense_block_forward.2} parent=0 // pred_check_branch
    %14 = sbr.rel (0) target = $region9
  $region8: #{dense_block_forward.2} parent=0 // pred_region
    _
  $region9: #{dense_block_forward.2} parent=0 // pred_fallthru
    _
  // Predicated region
  $region10: #{dense_block_forward.2} parent=0 // pred_check
    _
  $region11: #{dense_block_forward.2} parent=0 // pred_check_branch
    %16 = sbr.rel (0) target = $region13
  $region12: #{dense_block_forward.2} parent=0 // pred_region
    _
  $region13: #{dense_block_forward.2} parent=0 // pred_fallthru
    _
  // Predicated region
  $region14: #{dense_block_forward.2} parent=0 // pred_check
    _
  $region15: #{dense_block_forward.2} parent=0 // pred_check_branch
    %18 = sbr.rel (0) target = $region17
  $region16: #{dense_block_forward.2} parent=0 // pred_region
    _
  $region17: #{dense_block_forward.2} parent=0 // pred_fallthru
    _
  // Predicated region
  $region18: #{dense_block_forward.2} parent=0 // pred_check
    _
  $region19: #{dense_block_forward.2} parent=0 // pred_check_branch
    %20 = sbr.rel (0) target = $region21
  $region20: #{dense_block_forward.2} parent=0 // pred_region
    _
  $region21: #{dense_block_forward.2} parent=0 // pred_fallthru
    _
  // Predicated region
  $region22: #{dense_block_forward.2} parent=0 // pred_check
    _
  $region23: #{dense_block_forward.2} parent=0 // pred_check_branch
    %22 = sbr.rel (0) target = $region25
  $region24: #{dense_block_forward.2} parent=0 // pred_region
    _
  $region25: #{dense_block_forward.2} parent=0 // pred_fallthru
    _
  %v24 = vld [vmem:[%s0] sm:$0xf]
  %v25 = vld [vmem:[%s0 + $0x4] sm:$0xf]
  %v26 = vld [vmem:[%s0 + $0x8] sm:$0xf]
  %v27 = vld [vmem:[%s0 + $0xc] sm:$0xf]
  %v28 = vunpack.c.l.bf16 %v24
  %v29 = vunpack.c.l.bf16 %v25
  %v30 = vunpack.c.l.bf16 %v26
  %v31 = vunpack.c.l.bf16 %v27
  %v32 = vld [vmem:[%s1] sm:$0x1]
  %v34 = vlaneseq
  %v35 = vshrl.u32 %v34, 7
  %v36 = vsub.s32 0, %v35
  %v37 = vrot.slane %v32, %v36
  %v39 = vmul.f32 %v28, %v37
  %v40 = vmul.f32 %v29, %v37
  %v41 = vmul.f32 %v30, %v37
  %v42 = vmul.f32 %v31, %v37
  %v43 = vld [vmem:[%s2] sm:$0x1]
  %v45 = vlaneseq
  %v46 = vshrl.u32 %v45, 7
  %v47 = vsub.s32 0, %v46
  %v48 = vrot.slane %v43, %v47
  %v50 = vadd.f32 %v39, %v48
  %v51 = vadd.f32 %v40, %v48
  %v52 = vadd.f32 %v41, %v48
  %v53 = vadd.f32 %v42, %v48
  %v54 = vmax.f32 %v50, 0.0
  %v55 = vmax.f32 %v51, 0.0
  %v56 = vmax.f32 %v52, 0.0
  %v57 = vmax.f32 %v53, 0.0
  %v58 = vld [vmem:[%s4] sm:$0xff]
  %v59 = vld [vmem:[%s4 + $0x8] sm:$0xff]
  %v60 = vld [vmem:[%s4 + $0x10] sm:$0xff]
  %v61 = vld [vmem:[%s4 + $0x18] sm:$0xff]
  %63 = vset.pattern.permute.xlu0 0
  %64 = vperm.xlu0 %63, %v58
  %v65 = vpop.permute.xlu0 %64
  %68 = vset.pattern.permute.xlu0 0
  %69 = vperm.xlu0 %68, %v59
  %v70 = vpop.permute.xlu0 %69
  %73 = vset.pattern.permute.xlu0 0
  %74 = vperm.xlu0 %73, %v60
  %v75 = vpop.permute.xlu0 %74
  %78 = vset.pattern.permute.xlu0 0
  %79 = vperm.xlu0 %78, %v61
  %v80 = vpop.permute.xlu0 %79
  %v82 = vmul.f32 %v54, %v65
  %v83 = vmul.f32 %v55, %v70
  %v84 = vmul.f32 %v56, %v75
  %v85 = vmul.f32 %v57, %v80
  %v86 = vpack.c.bf16 %v83, %v82
  %v87 = vpack.c.bf16 %v85, %v84
  %v88 = vld [vmem:[%s3] sm:$0xff]
  %v89 = vld [vmem:[%s3 + $0x8] sm:$0xff]
  %v90 = vld [vmem:[%s3 + $0x10] sm:$0xff]
  %v91 = vld [vmem:[%s3 + $0x18] sm:$0xff]
  %93 = vset.pattern.permute.xlu0 0
  %94 = vperm.xlu0 %93, %v88
  %v95 = vpop.permute.xlu0 %94
  %98 = vset.pattern.permute.xlu0 0
  %99 = vperm.xlu0 %98, %v89
  %v100 = vpop.permute.xlu0 %99
  %103 = vset.pattern.permute.xlu0 0
  %104 = vperm.xlu0 %103, %v90
  %v105 = vpop.permute.xlu0 %104
  %108 = vset.pattern.permute.xlu0 0
  %109 = vperm.xlu0 %108, %v91
  %v110 = vpop.permute.xlu0 %109
  %v112 = vmul.f32 %v54, %v95
  %v113 = vmul.f32 %v55, %v100
  %v114 = vmul.f32 %v56, %v105
  %v115 = vmul.f32 %v57, %v110
  %v116 = vpack.c.bf16 %v113, %v112
  %v117 = vpack.c.bf16 %v115, %v114
  %v118 = vpack.c.bf16 %v55, %v54
  %v119 = vpack.c.bf16 %v57, %v56
  %122 = vrot.lane.b32.xlu0 %v118, 64
  %v123 = vpop.permute.xlu0 %122
  %124 = vrot.lane.b32.xlu0 %v119, 64
  %v125 = vpop.permute.xlu0 %124
  %vm128 = vcmask 1048064
  %129 = vst.msk [vmem:[#allocation2] sm:$0xff] %vm128, %v123
  %130 = vst.msk [vmem:[#allocation2 + $0x10] sm:$0xff] %vm128, %v125
  %vm131 = vcmask 516096
  %vm132 = vsmask.f32 256
  %vm133 = vmand %vm131, %vm132
  %v134 = vld [vmem:[#allocation2] sm:$0x1]
  %v135 = vsel %vm133, 0, %v134
  %136 = vst [vmem:[#allocation2] sm:$0x1] %v135
  %v138 = vshrl.u32 %v86, 16
  %v140 = vrot.slane %v138, 7
  %v141 = vshll.u32 %v86, 16
  %v143 = vor.u32 %v140, %v141
  %v145 = vshrl.u32 %v87, 16
  %v147 = vrot.slane %v145, 7
  %v148 = vshll.u32 %v87, 16
  %v150 = vor.u32 %v147, %v148
  %v151 = vsel %vm132, %v140, %v150
  %vm154 = vcmask 523264
  %vm155 = vsmask.f32 7938
  %vm156 = vmand %vm154, %vm155
  %v157 = vld [vmem:[#allocation2] sm:$0xff]
  %v158 = vsel %vm156, %v143, %v157
  %159 = vst [vmem:[#allocation2] sm:$0xff] %v158
  %vm160 = vcmask 523264
  %161 = vst.msk [vmem:[#allocation2 + $0x10] sm:$0xff] %vm160, %v151
  %vm162 = vcmask 523271
  %vm163 = vsmask.f32 7966
  %vm164 = vmand %vm162, %vm163
  %v165 = vld [vmem:[#allocation2 + $0x18] sm:$0x80]
  %v166 = vsel %vm164, 0, %v165
  %167 = vst [vmem:[#allocation2 + $0x18] sm:$0x80] %v166
  %vm168 = vsmask.f32 7424
  %v170 = vshrl.u32 %v116, 16
  %v172 = vshll.u32 %v116, 16
  %v174 = vrot.slane %v172, 1
  %v175 = vor.u32 %v170, %v174
  %v177 = vshll.u32 %v117, 16
  %v179 = vrot.slane %v177, 1
  %v180 = vsel %vm168, %v175, %v179
  %v181 = vshrl.u32 %v117, 16
  %v183 = vor.u32 %v181, %v179
  %186 = vst.msk [vmem:[#allocation2 + $0x8] sm:$0xff] %vm160, %v180
  %vm187 = vmand %vm154, %vm168
  %v188 = vld [vmem:[#allocation2 + $0x18] sm:$0xff]
  %v189 = vsel %vm187, %v183, %v188
  %190 = vst [vmem:[#allocation2 + $0x18] sm:$0xff] %v189
  %v191 = vld [vmem:[#allocation2] sm:$0xff]
  %v192 = vld [vmem:[#allocation2 + $0x8] sm:$0xff]
  %v193 = vld [vmem:[#allocation2 + $0x10] sm:$0xff]
  %v194 = vld [vmem:[#allocation2 + $0x18] sm:$0xff]
  %v195 = vld [vmem:[%s5] sm:$0xf]
  %v196 = vld [vmem:[%s5 + $0x4] sm:$0xf]
  %v197 = vld [vmem:[%s5 + $0x8] sm:$0xf]
  %v198 = vld [vmem:[%s5 + $0xc] sm:$0xf]
  %v199 = vld [vmem:[%s5 + $0x10] sm:$0xf]
  %v200 = vld [vmem:[%s5 + $0x14] sm:$0xf]
  %v201 = vld [vmem:[%s5 + $0x18] sm:$0xf]
  %v202 = vld [vmem:[%s5 + $0x1c] sm:$0xf]
  %v203 = vld [vmem:[%s5 + $0x20] sm:$0xf]
  %v204 = vld [vmem:[%s5 + $0x24] sm:$0xf]
  %v205 = vld [vmem:[%s5 + $0x28] sm:$0xf]
  %v206 = vld [vmem:[%s5 + $0x2c] sm:$0xf]
  %v207 = vld [vmem:[%s5 + $0x30] sm:$0xf]
  %v208 = vld [vmem:[%s5 + $0x34] sm:$0xf]
  %v209 = vld [vmem:[%s5 + $0x38] sm:$0xf]
  %v210 = vld [vmem:[%s5 + $0x3c] sm:$0xf]
  %v211 = vld [vmem:[%s5 + $0x40] sm:$0xf]
  %v212 = vld [vmem:[%s5 + $0x44] sm:$0xf]
  %v213 = vld [vmem:[%s5 + $0x48] sm:$0xf]
  %v214 = vld [vmem:[%s5 + $0x4c] sm:$0xf]
  %v215 = vld [vmem:[%s5 + $0x50] sm:$0xf]
  %v216 = vld [vmem:[%s5 + $0x54] sm:$0xf]
  %v217 = vld [vmem:[%s5 + $0x58] sm:$0xf]
  %v218 = vld [vmem:[%s5 + $0x5c] sm:$0xf]
  %v243 = vunpack.c.l.b16 %v195
  %v244 = vunpack.c.l.b16 %v196
  %v245 = vunpack.c.l.b16 %v197
  %v246 = vunpack.c.l.b16 %v198
  %v247 = vunpack.c.l.b16 %v199
  %v248 = vunpack.c.l.b16 %v200
  %v249 = vunpack.c.l.b16 %v201
  %v250 = vunpack.c.l.b16 %v202
  %v251 = vunpack.c.l.b16 %v203
  %v252 = vunpack.c.l.b16 %v204
  %v253 = vunpack.c.l.b16 %v205
  %v254 = vunpack.c.l.b16 %v206
  %v255 = vunpack.c.l.b16 %v207
  %v256 = vunpack.c.l.b16 %v208
  %v257 = vunpack.c.l.b16 %v209
  %v258 = vunpack.c.l.b16 %v210
  %v259 = vunpack.c.l.b16 %v211
  %v260 = vunpack.c.l.b16 %v212
  %v261 = vunpack.c.l.b16 %v213
  %v262 = vunpack.c.l.b16 %v214
  %v263 = vunpack.c.l.b16 %v215
  %v264 = vunpack.c.l.b16 %v216
  %v265 = vunpack.c.l.b16 %v217
  %v266 = vunpack.c.l.b16 %v218
  %v267 = vpack.c.b16 %v244, %v243
  %v268 = vpack.c.b16 %v246, %v245
  %v269 = vpack.c.b16 %v248, %v247
  %v270 = vpack.c.b16 %v250, %v249
  %v271 = vpack.c.b16 %v252, %v251
  %v272 = vpack.c.b16 %v254, %v253
  %v273 = vpack.c.b16 %v256, %v255
  %v274 = vpack.c.b16 %v258, %v257
  %v275 = vpack.c.b16 %v260, %v259
  %v276 = vpack.c.b16 %v262, %v261
  %v277 = vpack.c.b16 %v264, %v263
  %v278 = vpack.c.b16 %v266, %v265
  %v292 = vsel %vm160, %v192, 0
  %v295 = vsel %vm160, %v194, 0
  %297 = vmatprep.subr.bf16.mxu0 0
  %298 = vmatpush1.bf16.msra.mxu0 %v267
  %299 = vmatprep.subr.bf16.mxu0 0
  %300 = vmatpush1.bf16.msra.mxu0 %v268
  %301 = vmatprep.subr.bf16.mxu0 0
  %302 = vmatpush1.bf16.msra.mxu0 %v269
  %303 = vmatprep.subr.bf16.mxu0 0
  %304 = vmatpush1.bf16.msra.mxu0 %v270
  %305 = vmatprep.subr.bf16.mxu0 0
  %306 = vmatpush1.bf16.msra.mxu0 %v271
  %307 = vmatprep.subr.bf16.mxu0 0
  %308 = vmatpush1.bf16.msra.mxu0 %v272
  %309 = vmatprep.subr.bf16.mxu0 0
  %310 = vmatpush1.bf16.msra.mxu0 %v273
  %311 = vmatprep.subr.bf16.mxu0 0
  %312 = vmatpush1.bf16.msra.mxu0 %v274
  %313 = vmatprep.subr.bf16.mxu0 0
  %314 = vmatpush1.bf16.msra.mxu0 %v275
  %315 = vmatprep.subr.bf16.mxu0 0
  %316 = vmatpush1.bf16.msra.mxu0 %v276
  %317 = vmatprep.subr.bf16.mxu0 0
  %318 = vmatpush1.bf16.msra.mxu0 %v277
  %319 = vmatprep.subr.bf16.mxu0 0
  %320 = vmatpush1.bf16.msra.mxu0 %v278
  %321 = vmatprep.subr.bf16.mxu0 0
  %322 = vmatpush1.bf16.msra.mxu0 0
  %323 = vmatprep.subr.bf16.mxu0 0
  %324 = vmatpush1.bf16.msra.mxu0 0
  %325 = vmatprep.subr.bf16.mxu0 0
  %326 = vmatpush1.bf16.msra.mxu0 0
  %327 = vmatprep.subr.bf16.mxu0 0
  %328 = vmatpush1.bf16.msra.mxu0 0
  %329 = vmatprep.mubr.bf16.mxu0 %v292
  %330 = vmatmul.mubr.bf16.gmra.mrb[0].mxu0 %v191
  %v331 = vpop.f32.mrb[0].mxu0
  %v332 = vadd.f32 0.0, %v331
  %v333 = vpop.f32.mrb[0].mxu0
  %v334 = vpop.f32.mrb[0].mxu0
  %v335 = vadd.f32 0.0, %v334
  %v336 = vpop.f32.mrb[0].mxu0
  %337 = vmatprep.mubr.bf16.mxu0 %v295
  %338 = vmatmul.mubr.bf16.gmra.mrb[0].mxu0 %v193
  %v339 = vpop.f32.mrb[0].mxu0
  %v340 = vadd.f32 0.0, %v339
  %v341 = vpop.f32.mrb[0].mxu0
  %v342 = vpop.f32.mrb[0].mxu0
  %v343 = vadd.f32 0.0, %v342
  %v344 = vpop.f32.mrb[0].mxu0
  %345 = vdwg.mxu0
  %v346 = vpack.c.bf16 %v335, %v332
  %v347 = vpack.c.bf16 %v343, %v340
  %v350 = vunpack.c.l.b16 %v346
  %v351 = vunpack.c.h.b16 %v346
  %v352 = vunpack.c.l.b16 %v347
  %v353 = vunpack.c.h.b16 %v347
  %v354 = vpack.c.b16 %v350, %v350
  %v355 = vpack.c.b16 %v351, %v351
  %v356 = vpack.c.b16 %v352, %v352
  %v357 = vpack.c.b16 %v353, %v353
  %vm362 = vcmask 519168
  %363 = vst.msk [vmem:[%s6] sm:$0xf] %vm362, %v354
  %364 = vst.msk [vmem:[%s6 + $0x4] sm:$0xf] %vm362, %v355
  %365 = vst.msk [vmem:[%s6 + $0x8] sm:$0xf] %vm362, %v356
  %366 = vst.msk [vmem:[%s6 + $0xc] sm:$0xf] %vm362, %v357
  // Predicated region
  $region26: #{dense_block_forward.2} parent=0 // pred_check
    _
  $region27: #{dense_block_forward.2} parent=0 // pred_check_branch
    %368 = sbr.rel (0) target = $region29
  $region28: #{dense_block_forward.2} parent=0 // pred_region
    _
  $region29: #{dense_block_forward.2} parent=0 // pred_fallthru
    _
  // Predicated region
  $region30: #{dense_block_forward.2} parent=0 // pred_check
    _
  $region31: #{dense_block_forward.2} parent=0 // pred_check_branch
    %370 = sbr.rel (0) target = $region33
  $region32: #{dense_block_forward.2} parent=0 // pred_region
    _
  $region33: #{dense_block_forward.2} parent=0 // pred_fallthru
    _

// kernel: dense_block_forward.3
$region0: #{dense_block_forward.3}
  #allocation0 [shape = 'u32[]', space=smem, size = 0x4, offset = 0x4, fixed_abs, tag = 'smem constant byte address 0x4 - core index']
  #allocation1 [shape = 'u32[144,128]{1,0:T(1,128)}', space=vmem, size = 0x12000, scoped, tag = 'internal scratch']
  #allocation2 [shape = 'bf16[32,384]{1,0:T(16,128)(2,1)}', space=vmem, size = 0x6000, scoped, tag = 'scratch operand']
  %s0 = inlined_call_operand.vmem [shape: bf16[32,128], index: 0, kind: input, shape index: {}]
  %s1 = inlined_call_operand.vmem [shape: f32[1,128], index: 1, kind: input, shape index: {}]
  %s2 = inlined_call_operand.vmem [shape: f32[1,128], index: 2, kind: input, shape index: {}]
  %s3 = inlined_call_operand.vmem [shape: f32[32,1], index: 3, kind: input, shape index: {}]
  %s4 = inlined_call_operand.vmem [shape: f32[32,1], index: 4, kind: input, shape index: {}]
  %s5 = inlined_call_operand.vmem [shape: bf16[384,64], index: 5, kind: input, shape index: {}]
  %s6 = inlined_call_operand.vmem [shape: bf16[32,64], index: 6, kind: output, shape index: {}]
  %s7 = sld [smem:[#allocation0]]
  $region34: #{dense_block_forward.3} parent=0
    _
  %s9 = ssub.s32 1, %s7
  %s10 = scalar_select 0, %s9, %s7
  // Predicated region
  $region2: #{dense_block_forward.3} parent=0 // pred_check
    _
  $region3: #{dense_block_forward.3} parent=0 // pred_check_branch
    %12 = sbr.rel (0) target = $region5
  $region4: #{dense_block_forward.3} parent=0 // pred_region
    _
  $region5: #{dense_block_forward.3} parent=0 // pred_fallthru
    _
  // Predicated region
  $region6: #{dense_block_forward.3} parent=0 // pred_check
    _
  $region7: #{dense_block_forward.3} parent=0 // pred_check_branch
    %14 = sbr.rel (0) target = $region9
  $region8: #{dense_block_forward.3} parent=0 // pred_region
    _
  $region9: #{dense_block_forward.3} parent=0 // pred_fallthru
    _
  // Predicated region
  $region10: #{dense_block_forward.3} parent=0 // pred_check
    _
  $region11: #{dense_block_forward.3} parent=0 // pred_check_branch
    %16 = sbr.rel (0) target = $region13
  $region12: #{dense_block_forward.3} parent=0 // pred_region
    _
  $region13: #{dense_block_forward.3} parent=0 // pred_fallthru
    _
  // Predicated region
  $region14: #{dense_block_forward.3} parent=0 // pred_check
    _
  $region15: #{dense_block_forward.3} parent=0 // pred_check_branch
    %18 = sbr.rel (0) target = $region17
  $region16: #{dense_block_forward.3} parent=0 // pred_region
    _
  $region17: #{dense_block_forward.3} parent=0 // pred_fallthru
    _
  // Predicated region
  $region18: #{dense_block_forward.3} parent=0 // pred_check
    _
  $region19: #{dense_block_forward.3} parent=0 // pred_check_branch
    %20 = sbr.rel (0) target = $region21
  $region20: #{dense_block_forward.3} parent=0 // pred_region
    _
  $region21: #{dense_block_forward.3} parent=0 // pred_fallthru
    _
  // Predicated region
  $region22: #{dense_block_forward.3} parent=0 // pred_check
    _
  $region23: #{dense_block_forward.3} parent=0 // pred_check_branch
    %22 = sbr.rel (0) target = $region25
  $region24: #{dense_block_forward.3} parent=0 // pred_region
    _
  $region25: #{dense_block_forward.3} parent=0 // pred_fallthru
    _
  %v24 = vld [vmem:[%s0] sm:$0xf]
  %v25 = vld [vmem:[%s0 + $0x4] sm:$0xf]
  %v26 = vld [vmem:[%s0 + $0x8] sm:$0xf]
  %v27 = vld [vmem:[%s0 + $0xc] sm:$0xf]
  %v28 = vunpack.c.l.bf16 %v24
  %v29 = vunpack.c.l.bf16 %v25
  %v30 = vunpack.c.l.bf16 %v26
  %v31 = vunpack.c.l.bf16 %v27
  %v32 = vld [vmem:[%s1] sm:$0x1]
  %v34 = vlaneseq
  %v35 = vshrl.u32 %v34, 7
  %v36 = vsub.s32 0, %v35
  %v37 = vrot.slane %v32, %v36
  %v39 = vmul.f32 %v28, %v37
  %v40 = vmul.f32 %v29, %v37
  %v41 = vmul.f32 %v30, %v37
  %v42 = vmul.f32 %v31, %v37
  %v43 = vld [vmem:[%s2] sm:$0x1]
  %v45 = vlaneseq
  %v46 = vshrl.u32 %v45, 7
  %v47 = vsub.s32 0, %v46
  %v48 = vrot.slane %v43, %v47
  %v50 = vadd.f32 %v39, %v48
  %v51 = vadd.f32 %v40, %v48
  %v52 = vadd.f32 %v41, %v48
  %v53 = vadd.f32 %v42, %v48
  %v54 = vmax.f32 %v50, 0.0
  %v55 = vmax.f32 %v51, 0.0
  %v56 = vmax.f32 %v52, 0.0
  %v57 = vmax.f32 %v53, 0.0
  %v58 = vld [vmem:[%s4] sm:$0xff]
  %v59 = vld [vmem:[%s4 + $0x8] sm:$0xff]
  %v60 = vld [vmem:[%s4 + $0x10] sm:$0xff]
  %v61 = vld [vmem:[%s4 + $0x18] sm:$0xff]
  %63 = vset.pattern.permute.xlu0 0
  %64 = vperm.xlu0 %63, %v58
  %v65 = vpop.permute.xlu0 %64
  %68 = vset.pattern.permute.xlu0 0
  %69 = vperm.xlu0 %68, %v59
  %v70 = vpop.permute.xlu0 %69
  %73 = vset.pattern.permute.xlu0 0
  %74 = vperm.xlu0 %73, %v60
  %v75 = vpop.permute.xlu0 %74
  %78 = vset.pattern.permute.xlu0 0
  %79 = vperm.xlu0 %78, %v61
  %v80 = vpop.permute.xlu0 %79
  %v82 = vmul.f32 %v54, %v65
  %v83 = vmul.f32 %v55, %v70
  %v84 = vmul.f32 %v56, %v75
  %v85 = vmul.f32 %v57, %v80
  %v86 = vpack.c.bf16 %v83, %v82
  %v87 = vpack.c.bf16 %v85, %v84
  %v88 = vld [vmem:[%s3] sm:$0xff]
  %v89 = vld [vmem:[%s3 + $0x8] sm:$0xff]
  %v90 = vld [vmem:[%s3 + $0x10] sm:$0xff]
  %v91 = vld [vmem:[%s3 + $0x18] sm:$0xff]
  %93 = vset.pattern.permute.xlu0 0
  %94 = vperm.xlu0 %93, %v88
  %v95 = vpop.permute.xlu0 %94
  %98 = vset.pattern.permute.xlu0 0
  %99 = vperm.xlu0 %98, %v89
  %v100 = vpop.permute.xlu0 %99
  %103 = vset.pattern.permute.xlu0 0
  %104 = vperm.xlu0 %103, %v90
  %v105 = vpop.permute.xlu0 %104
  %108 = vset.pattern.permute.xlu0 0
  %109 = vperm.xlu0 %108, %v91
  %v110 = vpop.permute.xlu0 %109
  %v112 = vmul.f32 %v54, %v95
  %v113 = vmul.f32 %v55, %v100
  %v114 = vmul.f32 %v56, %v105
  %v115 = vmul.f32 %v57, %v110
  %v116 = vpack.c.bf16 %v113, %v112
  %v117 = vpack.c.bf16 %v115, %v114
  %v118 = vpack.c.bf16 %v55, %v54
  %v119 = vpack.c.bf16 %v57, %v56
  %120 = vst [vmem:[#allocation2 + $0x8] sm:$0xff] %v118
  %121 = vst [vmem:[#allocation2 + $0x20] sm:$0xff] %v119
  %vm122 = vcmask 1040384
  %vm123 = vsmask.f32 256
  %vm124 = vmand %vm122, %vm123
  %v125 = vld [vmem:[#allocation2] sm:$0x1]
  %v126 = vsel %vm124, 0, %v125
  %127 = vst [vmem:[#allocation2] sm:$0x1] %v126
  %v129 = vshrl.u32 %v86, 16
  %v131 = vrot.slane %v129, 7
  %v132 = vshll.u32 %v86, 16
  %v134 = vor.u32 %v131, %v132
  %v136 = vshrl.u32 %v87, 16
  %v138 = vrot.slane %v136, 7
  %v139 = vshll.u32 %v87, 16
  %v141 = vor.u32 %v138, %v139
  %v142 = vsel %vm123, %v131, %v141
  %vm145 = vcmask 1047552
  %vm146 = vsmask.f32 7938
  %vm147 = vmand %vm145, %vm146
  %v148 = vld [vmem:[#allocation2] sm:$0xff]
  %v149 = vsel %vm147, %v134, %v148
  %150 = vst [vmem:[#allocation2] sm:$0xff] %v149
  %151 = vst [vmem:[#allocation2 + $0x18] sm:$0xff] %v142
  %vm152 = vcmask 1047559
  %vm153 = vsmask.f32 7966
  %vm154 = vmand %vm152, %vm153
  %v155 = vld [vmem:[#allocation2 + $0x28] sm:$0x80]
  %v156 = vsel %vm154, 0, %v155
  %157 = vst [vmem:[#allocation2 + $0x28] sm:$0x80] %v156
  %vm158 = vsmask.f32 7424
  %v160 = vshrl.u32 %v116, 16
  %v162 = vshll.u32 %v116, 16
  %v164 = vrot.slane %v162, 1
  %v165 = vor.u32 %v160, %v164
  %v167 = vshll.u32 %v117, 16
  %v169 = vrot.slane %v167, 1
  %v170 = vsel %vm158, %v165, %v169
  %v171 = vshrl.u32 %v117, 16
  %v173 = vor.u32 %v171, %v169
  %176 = vst [vmem:[#allocation2 + $0x10] sm:$0xff] %v170
  %vm177 = vmand %vm145, %vm158
  %v178 = vld [vmem:[#allocation2 + $0x28] sm:$0xff]
  %v179 = vsel %vm177, %v173, %v178
  %180 = vst [vmem:[#allocation2 + $0x28] sm:$0xff] %v179
  %v181 = vld [vmem:[#allocation2] sm:$0xff]
  %v182 = vld [vmem:[#allocation2 + $0x8] sm:$0xff]
  %v183 = vld [vmem:[#allocation2 + $0x10] sm:$0xff]
  %v184 = vld [vmem:[#allocation2 + $0x18] sm:$0xff]
  %v185 = vld [vmem:[#allocation2 + $0x20] sm:$0xff]
  %v186 = vld [vmem:[#allocation2 + $0x28] sm:$0xff]
  %v187 = vld [vmem:[%s5] sm:$0xf]
  %v188 = vld [vmem:[%s5 + $0x4] sm:$0xf]
  %v189 = vld [vmem:[%s5 + $0x8] sm:$0xf]
  %v190 = vld [vmem:[%s5 + $0xc] sm:$0xf]
  %v191 = vld [vmem:[%s5 + $0x10] sm:$0xf]
  %v192 = vld [vmem:[%s5 + $0x14] sm:$0xf]
  %v193 = vld [vmem:[%s5 + $0x18] sm:$0xf]
  %v194 = vld [vmem:[%s5 + $0x1c] sm:$0xf]
  %v195 = vld [vmem:[%s5 + $0x20] sm:$0xf]
  %v196 = vld [vmem:[%s5 + $0x24] sm:$0xf]
  %v197 = vld [vmem:[%s5 + $0x28] sm:$0xf]
  %v198 = vld [vmem:[%s5 + $0x2c] sm:$0xf]
  %v199 = vld [vmem:[%s5 + $0x30] sm:$0xf]
  %v200 = vld [vmem:[%s5 + $0x34] sm:$0xf]
  %v201 = vld [vmem:[%s5 + $0x38] sm:$0xf]
  %v202 = vld [vmem:[%s5 + $0x3c] sm:$0xf]
  %v203 = vld [vmem:[%s5 + $0x40] sm:$0xf]
  %v204 = vld [vmem:[%s5 + $0x44] sm:$0xf]
  %v205 = vld [vmem:[%s5 + $0x48] sm:$0xf]
  %v206 = vld [vmem:[%s5 + $0x4c] sm:$0xf]
  %v207 = vld [vmem:[%s5 + $0x50] sm:$0xf]
  %v208 = vld [vmem:[%s5 + $0x54] sm:$0xf]
  %v209 = vld [vmem:[%s5 + $0x58] sm:$0xf]
  %v210 = vld [vmem:[%s5 + $0x5c] sm:$0xf]
  %v211 = vld [vmem:[%s5 + $0x60] sm:$0xf]
  %v212 = vld [vmem:[%s5 + $0x64] sm:$0xf]
  %v213 = vld [vmem:[%s5 + $0x68] sm:$0xf]
  %v214 = vld [vmem:[%s5 + $0x6c] sm:$0xf]
  %v215 = vld [vmem:[%s5 + $0x70] sm:$0xf]
  %v216 = vld [vmem:[%s5 + $0x74] sm:$0xf]
  %v217 = vld [vmem:[%s5 + $0x78] sm:$0xf]
  %v218 = vld [vmem:[%s5 + $0x7c] sm:$0xf]
  %v219 = vld [vmem:[%s5 + $0x80] sm:$0xf]
  %v220 = vld [vmem:[%s5 + $0x84] sm:$0xf]
  %v221 = vld [vmem:[%s5 + $0x88] sm:$0xf]
  %v222 = vld [vmem:[%s5 + $0x8c] sm:$0xf]
  %v223 = vld [vmem:[%s5 + $0x90] sm:$0xf]
  %v224 = vld [vmem:[%s5 + $0x94] sm:$0xf]
  %v225 = vld [vmem:[%s5 + $0x98] sm:$0xf]
  %v226 = vld [vmem:[%s5 + $0x9c] sm:$0xf]
  %v227 = vld [vmem:[%s5 + $0xa0] sm:$0xf]
  %v228 = vld [vmem:[%s5 + $0xa4] sm:$0xf]
  %v229 = vld [vmem:[%s5 + $0xa8] sm:$0xf]
  %v230 = vld [vmem:[%s5 + $0xac] sm:$0xf]
  %v231 = vld [vmem:[%s5 + $0xb0] sm:$0xf]
  %v232 = vld [vmem:[%s5 + $0xb4] sm:$0xf]
  %v233 = vld [vmem:[%s5 + $0xb8] sm:$0xf]
  %v234 = vld [vmem:[%s5 + $0xbc] sm:$0xf]
  %v283 = vunpack.c.l.b16 %v187
  %v284 = vunpack.c.l.b16 %v188
  %v285 = vunpack.c.l.b16 %v189
  %v286 = vunpack.c.l.b16 %v190
  %v287 = vunpack.c.l.b16 %v191
  %v288 = vunpack.c.l.b16 %v192
  %v289 = vunpack.c.l.b16 %v193
  %v290 = vunpack.c.l.b16 %v194
  %v291 = vunpack.c.l.b16 %v195
  %v292 = vunpack.c.l.b16 %v196
  %v293 = vunpack.c.l.b16 %v197
  %v294 = vunpack.c.l.b16 %v198
  %v295 = vunpack.c.l.b16 %v199
  %v296 = vunpack.c.l.b16 %v200
  %v297 = vunpack.c.l.b16 %v201
  %v298 = vunpack.c.l.b16 %v202
  %v299 = vunpack.c.l.b16 %v203
  %v300 = vunpack.c.l.b16 %v204
  %v301 = vunpack.c.l.b16 %v205
  %v302 = vunpack.c.l.b16 %v206
  %v303 = vunpack.c.l.b16 %v207
  %v304 = vunpack.c.l.b16 %v208
  %v305 = vunpack.c.l.b16 %v209
  %v306 = vunpack.c.l.b16 %v210
  %v307 = vunpack.c.l.b16 %v211
  %v308 = vunpack.c.l.b16 %v212
  %v309 = vunpack.c.l.b16 %v213
  %v310 = vunpack.c.l.b16 %v214
  %v311 = vunpack.c.l.b16 %v215
  %v312 = vunpack.c.l.b16 %v216
  %v313 = vunpack.c.l.b16 %v217
  %v314 = vunpack.c.l.b16 %v218
  %v315 = vunpack.c.l.b16 %v219
  %v316 = vunpack.c.l.b16 %v220
  %v317 = vunpack.c.l.b16 %v221
  %v318 = vunpack.c.l.b16 %v222
  %v319 = vunpack.c.l.b16 %v223
  %v320 = vunpack.c.l.b16 %v224
  %v321 = vunpack.c.l.b16 %v225
  %v322 = vunpack.c.l.b16 %v226
  %v323 = vunpack.c.l.b16 %v227
  %v324 = vunpack.c.l.b16 %v228
  %v325 = vunpack.c.l.b16 %v229
  %v326 = vunpack.c.l.b16 %v230
  %v327 = vunpack.c.l.b16 %v231
  %v328 = vunpack.c.l.b16 %v232
  %v329 = vunpack.c.l.b16 %v233
  %v330 = vunpack.c.l.b16 %v234
  %v331 = vpack.c.b16 %v284, %v283
  %v332 = vpack.c.b16 %v286, %v285
  %v333 = vpack.c.b16 %v288, %v287
  %v334 = vpack.c.b16 %v290, %v289
  %v335 = vpack.c.b16 %v292, %v291
  %v336 = vpack.c.b16 %v294, %v293
  %v337 = vpack.c.b16 %v296, %v295
  %v338 = vpack.c.b16 %v298, %v297
  %v339 = vpack.c.b16 %v300, %v299
  %v340 = vpack.c.b16 %v302, %v301
  %v341 = vpack.c.b16 %v304, %v303
  %v342 = vpack.c.b16 %v306, %v305
  %v343 = vpack.c.b16 %v308, %v307
  %v344 = vpack.c.b16 %v310, %v309
  %v345 = vpack.c.b16 %v312, %v311
  %v346 = vpack.c.b16 %v314, %v313
  %v347 = vpack.c.b16 %v316, %v315
  %v348 = vpack.c.b16 %v318, %v317
  %v349 = vpack.c.b16 %v320, %v319
  %v350 = vpack.c.b16 %v322, %v321
  %v351 = vpack.c.b16 %v324, %v323
  %v352 = vpack.c.b16 %v326, %v325
  %v353 = vpack.c.b16 %v328, %v327
  %v354 = vpack.c.b16 %v330, %v329
  %379 = vmatprep.subr.bf16.mxu0 0
  %380 = vmatpush1.bf16.msra.mxu0 %v331
  %381 = vmatprep.subr.bf16.mxu0 0
  %382 = vmatpush1.bf16.msra.mxu0 %v332
  %383 = vmatprep.subr.bf16.mxu0 0
  %384 = vmatpush1.bf16.msra.mxu0 %v333
  %385 = vmatprep.subr.bf16.mxu0 0
  %386 = vmatpush1.bf16.msra.mxu0 %v334
  %387 = vmatprep.subr.bf16.mxu0 0
  %388 = vmatpush1.bf16.msra.mxu0 %v335
  %389 = vmatprep.subr.bf16.mxu0 0
  %390 = vmatpush1.bf16.msra.mxu0 %v336
  %391 = vmatprep.subr.bf16.mxu0 0
  %392 = vmatpush1.bf16.msra.mxu0 %v337
  %393 = vmatprep.subr.bf16.mxu0 0
  %394 = vmatpush1.bf16.msra.mxu0 %v338
  %395 = vmatprep.subr.bf16.mxu0 0
  %396 = vmatpush1.bf16.msra.mxu0 %v339
  %397 = vmatprep.subr.bf16.mxu0 0
  %398 = vmatpush1.bf16.msra.mxu0 %v340
  %399 = vmatprep.subr.bf16.mxu0 0
  %400 = vmatpush1.bf16.msra.mxu0 %v341
  %401 = vmatprep.subr.bf16.mxu0 0
  %402 = vmatpush1.bf16.msra.mxu0 %v342
  %403 = vmatprep.subr.bf16.mxu0 0
  %404 = vmatpush1.bf16.msra.mxu0 %v343
  %405 = vmatprep.subr.bf16.mxu0 0
  %406 = vmatpush1.bf16.msra.mxu0 %v344
  %407 = vmatprep.subr.bf16.mxu0 0
  %408 = vmatpush1.bf16.msra.mxu0 %v345
  %409 = vmatprep.subr.bf16.mxu0 0
  %410 = vmatpush1.bf16.msra.mxu0 %v346
  %411 = vmatprep.mubr.bf16.mxu0 %v182
  %412 = vmatmul.mubr.bf16.gmra.mrb[0].mxu0 %v181
  %v413 = vpop.f32.mrb[0].mxu0
  %v414 = vadd.f32 0.0, %v413
  %v415 = vpop.f32.mrb[0].mxu0
  %v416 = vpop.f32.mrb[0].mxu0
  %v417 = vadd.f32 0.0, %v416
  %v418 = vpop.f32.mrb[0].mxu0
  %419 = vmatprep.mubr.bf16.mxu0 %v185
  %420 = vmatmul.mubr.bf16.gmra.mrb[0].mxu0 %v184
  %v421 = vpop.f32.mrb[0].mxu0
  %v422 = vadd.f32 0.0, %v421
  %v423 = vpop.f32.mrb[0].mxu0
  %v424 = vpop.f32.mrb[0].mxu0
  %v425 = vadd.f32 0.0, %v424
  %v426 = vpop.f32.mrb[0].mxu0
  %427 = vdwg.mxu0
  %428 = vmatprep.subr.bf16.mxu0 0
  %429 = vmatpush1.bf16.msra.mxu0 %v347
  %430 = vmatprep.subr.bf16.mxu0 0
  %431 = vmatpush1.bf16.msra.mxu0 %v348
  %432 = vmatprep.subr.bf16.mxu0 0
  %433 = vmatpush1.bf16.msra.mxu0 %v349
  %434 = vmatprep.subr.bf16.mxu0 0
  %435 = vmatpush1.bf16.msra.mxu0 %v350
  %436 = vmatprep.subr.bf16.mxu0 0
  %437 = vmatpush1.bf16.msra.mxu0 %v351
  %438 = vmatprep.subr.bf16.mxu0 0
  %439 = vmatpush1.bf16.msra.mxu0 %v352
  %440 = vmatprep.subr.bf16.mxu0 0
  %441 = vmatpush1.bf16.msra.mxu0 %v353
  %442 = vmatprep.subr.bf16.mxu0 0
  %443 = vmatpush1.bf16.msra.mxu0 %v354
  %444 = vmatprep.subr.bf16.mxu0 0
  %445 = vmatpush1.bf16.msra.mxu0 0
  %446 = vmatprep.subr.bf16.mxu0 0
  %447 = vmatpush1.bf16.msra.mxu0 0
  %448 = vmatprep.subr.bf16.mxu0 0
  %449 = vmatpush1.bf16.msra.mxu0 0
  %450 = vmatprep.subr.bf16.mxu0 0
  %451 = vmatpush1.bf16.msra.mxu0 0
  %452 = vmatprep.subr.bf16.mxu0 0
  %453 = vmatpush1.bf16.msra.mxu0 0
  %454 = vmatprep.subr.bf16.mxu0 0
  %455 = vmatpush1.bf16.msra.mxu0 0
  %456 = vmatprep.subr.bf16.mxu0 0
  %457 = vmatpush1.bf16.msra.mxu0 0
  %458 = vmatprep.subr.bf16.mxu0 0
  %459 = vmatpush1.bf16.msra.mxu0 0
  %460 = vmatprep.mubr.bf16.mxu0 0
  %461 = vmatmul.mubr.bf16.gmra.mrb[0].mxu0 %v183
  %v462 = vpop.f32.mrb[0].mxu0
  %v463 = vadd.f32 %v414, %v462
  %v464 = vpop.f32.mrb[0].mxu0
  %v465 = vpop.f32.mrb[0].mxu0
  %v466 = vadd.f32 %v417, %v465
  %v467 = vpop.f32.mrb[0].mxu0
  %468 = vmatprep.mubr.bf16.mxu0 0
  %469 = vmatmul.mubr.bf16.gmra.mrb[0].mxu0 %v186
  %v470 = vpop.f32.mrb[0].mxu0
  %v471 = vadd.f32 %v422, %v470
  %v472 = vpop.f32.mrb[0].mxu0
  %v473 = vpop.f32.mrb[0].mxu0
  %v474 = vadd.f32 %v425, %v473
  %v475 = vpop.f32.mrb[0].mxu0
  %476 = vdwg.mxu0
  %v477 = vpack.c.bf16 %v466, %v463
  %v478 = vpack.c.bf16 %v474, %v471
  %v481 = vunpack.c.l.b16 %v477
  %v482 = vunpack.c.h.b16 %v477
  %v483 = vunpack.c.l.b16 %v478
  %v484 = vunpack.c.h.b16 %v478
  %v485 = vpack.c.b16 %v481, %v481
  %v486 = vpack.c.b16 %v482, %v482
  %v487 = vpack.c.b16 %v483, %v483
  %v488 = vpack.c.b16 %v484, %v484
  %vm493 = vcmask 519168
  %494 = vst.msk [vmem:[%s6] sm:$0xf] %vm493, %v485
  %495 = vst.msk [vmem:[%s6 + $0x4] sm:$0xf] %vm493, %v486
  %496 = vst.msk [vmem:[%s6 + $0x8] sm:$0xf] %vm493, %v487
  %497 = vst.msk [vmem:[%s6 + $0xc] sm:$0xf] %vm493, %v488
  // Predicated region
  $region26: #{dense_block_forward.3} parent=0 // pred_check
    _
  $region27: #{dense_block_forward.3} parent=0 // pred_check_branch
    %499 = sbr.rel (0) target = $region29
  $region28: #{dense_block_forward.3} parent=0 // pred_region
    _
  $region29: #{dense_block_forward.3} parent=0 // pred_fallthru
    _
  // Predicated region
  $region30: #{dense_block_forward.3} parent=0 // pred_check
    _
  $region31: #{dense_block_forward.3} parent=0 // pred_check_branch
    %501 = sbr.rel (0) target = $region33
  $region32: #{dense_block_forward.3} parent=0 // pred_region
    _
  $region33: #{dense_block_forward.3} parent=0 // pred_fallthru
    _

</llo_original>
